<compile_context>
chip_gen: v7x
topology: tpu7x:2x2x1
jax: 0.10.0
libtpu: 0.0.40
codegen_flags: <defaults>
</compile_context>

<pallas_src>
import jax
import jax.numpy as jnp
from jax.experimental import pallas as pl
from jax.experimental.pallas import tpu as pltpu


def _identity_copy_kernel(x_ref, o_ref):
    # Pure memory-bound identity: whole-tile load + whole-tile store.
    o_ref[...] = x_ref[...]


def long_term_memory_forward(x: jax.Array, context: jax.Array | None = None) -> jax.Array:
    """Faithful (and fastest) implementation of LongTermMemory.forward: identity.

    The reference module has no parameters and its forward returns `x`
    unchanged; launching a copy kernel only adds 2x the array size in HBM
    traffic plus launch overhead, so the production path returns `x`.
    """
    del context  # reference forward ignores it
    return x


def _vmem_capacity_bytes() -> int:
    """Per-TensorCore VMEM capacity; falls back to v7x's 64 MiB (the smallest)."""
    try:
        info = pltpu.get_tpu_info()
        cap = int(getattr(info, "vmem_capacity_bytes", 0))
        if cap > 0:
            return cap
    except Exception:
        pass
    return 64 * 1024 * 1024


def _sublane_multiple(dtype) -> int:
    """Native sublane tile: 8 rows for 4-byte, 16 for 2-byte, 32 for 1-byte dtypes."""
    itemsize = jnp.dtype(dtype).itemsize
    return max(8, 32 // max(1, itemsize))


def _choose_tile_rows(rows: int, lane: int, itemsize: int, sublane: int, vmem_cap: int) -> int:
    """Pick a lane-dense tile height: big (amortizes per-step overhead), sublane
    aligned, preferably an exact divisor of `rows`, and small enough that the
    grid keeps >= 2 steps for multi-MiB arrays (v7x megacore + DMA overlap)."""
    row_bytes = lane * itemsize
    # 4 live buffers (double-buffered in + out) should stay under ~50% of VMEM.
    target_bytes = min(16 << 20, max(1 << 20, vmem_cap // 8))
    tile_rows = max(sublane, (target_bytes // row_bytes // sublane) * sublane)

    total_bytes = rows * row_bytes
    if tile_rows >= rows:
        if total_bytes > (1 << 20) and rows >= 2 * sublane:
            # Keep at least 2 grid steps so both v7x TensorCores drive HBM
            # and the input/output DMA pipeline can overlap.
            tile_rows = max(sublane, (rows // 2 // sublane) * sublane)
        else:
            return rows  # single full-extent tile — always legal
    # Prefer a tile that divides rows exactly (no masked partial last block).
    lower = max(sublane, tile_rows // 2)
    for cand in range(tile_rows, lower - 1, -sublane):
        if rows % cand == 0:
            return cand
    return tile_rows


def long_term_memory_forward_pallas(x: jax.Array, context: jax.Array | None = None) -> jax.Array:
    """Identity forward materialized as a lane-dense tiled Pallas copy kernel."""
    del context  # reference forward ignores it
    orig_shape = x.shape
    n = x.size

    # Lane-dense layout: last dim a large multiple of 128 so every store is a
    # full-width unmasked `vst` (the biggest single lever for pure copies).
    lane = 0
    for cand in (8192, 4096, 2048, 1024, 512, 256, 128):
        if n % cand == 0:
            lane = cand
            break
    if lane == 0:
        # TODO(synk): element count not a multiple of 128 — fall back to the
        # zero-cost identity rather than emit a masked partial-lane copy.
        return x

    rows = n // lane
    itemsize = jnp.dtype(x.dtype).itemsize
    sublane = _sublane_multiple(x.dtype)
    vmem_cap = _vmem_capacity_bytes()

    tile_rows = _choose_tile_rows(rows, lane, itemsize, sublane, vmem_cap)
    tile_bytes = tile_rows * lane * itemsize
    vmem_limit = int(min(vmem_cap, max(32 << 20, 4 * tile_bytes + (4 << 20))))

    grid = (pl.cdiv(rows, tile_rows),)
    x2d = x.reshape(rows, lane)

    out2d = pl.pallas_call(
        _identity_copy_kernel,
        out_shape=jax.ShapeDtypeStruct((rows, lane), x.dtype),
        grid_spec=pl.GridSpec(
            grid=grid,
            in_specs=[pl.BlockSpec((tile_rows, lane), lambda i: (i, 0))],
            out_specs=pl.BlockSpec((tile_rows, lane), lambda i: (i, 0)),
        ),
        # Output is bit-identical to the input: let XLA reuse the input buffer
        # when the caller donates it (no bandwidth change, halves peak HBM).
        input_output_aliases={0: 0},
        compiler_params=pltpu.CompilerParams(
            # Single parallel grid axis: on v7x the steps shard across both
            # TensorCores so both drive HBM concurrently.
            dimension_semantics=("parallel",),
            vmem_limit_bytes=vmem_limit,
        ),
    )(x2d)

    return out2d.reshape(orig_shape)


if __name__ == "__main__":
    key = jax.random.PRNGKey(0)
    k_x, k_ctx = jax.random.split(key)

    # Small shapes consistent with the module: batch=2, seq=8, dim=32.
    x = jax.random.normal(k_x, (2, 8, 32), dtype=jnp.float32)
    context = jax.random.normal(k_ctx, (2, 8, 32), dtype=jnp.float32)

    # Recommended zero-cost path (no kernel launch).
    out_fast = long_term_memory_forward(x, context)

    # Pallas-kernel path: run once and verify exact identity.
    out = jax.block_until_ready(long_term_memory_forward_pallas(x, context))
    assert out.shape == x.shape and out.dtype == x.dtype
    assert jnp.array_equal(out, x), "identity forward mismatch (pallas path, f32)"
    assert jnp.array_equal(out_fast, x), "identity forward mismatch (fast path)"

    # Exercise the dtype-aware sublane path once with a bf16 input as well.
    x_bf16 = jax.random.normal(key, (2, 8, 32), dtype=jnp.float32).astype(jnp.bfloat16)
    out_bf16 = jax.block_until_ready(long_term_memory_forward_pallas(x_bf16))
    assert jnp.array_equal(out_bf16, x_bf16), "identity forward mismatch (pallas path, bf16)"

    print("KERNEL_OK")
</pallas_src>

<mosaic_0001>
module attributes {stable_mosaic.version = 11 : i64} {
  func.func @_identity_copy_kernel(%arg0: i32, %arg1: memref<1x512xf32, #tpu.memory_space<vmem>>, %arg2: memref<1x512xf32, #tpu.memory_space<vmem>>) attributes {dimension_semantics = [#tpu.dimension_semantics<parallel>], iteration_bounds = array<i64: 1>, scalar_prefetch = 0 : i64, scratch_operands = 0 : i64, tpu.core_type = #tpu.core_type<tc>, window_params = [{transform_indices = @transform_0, window_bounds = array<i64: 1, 512>}, {transform_indices = @transform_1, window_bounds = array<i64: 1, 512>}]} {
    %c0 = arith.constant 0 : index
    %c0_0 = arith.constant 0 : index
    %0 = vector.load %arg1[%c0, %c0_0] : memref<1x512xf32, #tpu.memory_space<vmem>>, vector<1x512xf32>
    %c0_1 = arith.constant 0 : index
    %c0_2 = arith.constant 0 : index
    %1 = vector.load %arg2[%c0_1, %c0_2] : memref<1x512xf32, #tpu.memory_space<vmem>>, vector<1x512xf32>
    tpu.vector_store %arg2[%c0_1, %c0_2], %0 {strides = array<i32>} : memref<1x512xf32, #tpu.memory_space<vmem>>, vector<1x512xf32>,
    return
  }
  func.func @transform_0(%arg0: i32) -> (i32, i32) {
    %c0_i32 = arith.constant 0 : i32
    %c0_i32_0 = arith.constant 0 : i32
    return %arg0, %c0_i32 : i32, i32
  }
  func.func @transform_1(%arg0: i32) -> (i32, i32) {
    %c0_i32 = arith.constant 0 : i32
    %c0_i32_0 = arith.constant 0 : i32
    return %arg0, %c0_i32 : i32, i32
  }
}

</mosaic_0001>

<llo_original>
// kernel: tpu_custom_call.1
$region0: #{tpu_custom_call.1}
  #allocation0 [shape = 'u32[]', space=smem, size = 0x4, offset = 0x4, fixed_abs, tag = 'smem constant byte address 0x4 - core index']
  #allocation1 [shape = 'u32[144,128]{1,0:T(1,128)}', space=vmem, size = 0x12000, scoped, tag = 'internal scratch']
  %s0 = inlined_call_operand.hbm [shape: f32[1,512], index: 0, kind: input, shape index: {}, may-alias: {0,1}]
  %s1 = inlined_call_operand.hbm [shape: f32[1,512], index: 1, kind: output, shape index: {}, may-alias: {0,1}]
  %s2 = sld [smem:[#allocation0]]
  $region18: #{tpu_custom_call.1} parent=0
    _
  %s4 = ssub.s32 1, %s2
  %s5 = scalar_select 0, %s4, %s2
  $region1: #{tpu_custom_call.1} parent=0
    #allocation2 [shape = 'u8[2048]{0}', space=vmem, size = 0x800, scoped, tag = 'input window, operand 0, single buffered']
    #allocation3 [shape = 's32[1]{0}', space=sflag, size = 0x4, scoped, tag = 'scoped memory for tpu_custom_call.1']
    #allocation4 [shape = 's32[1]{0}', space=sflag, size = 0x4, scoped, tag = 'scoped memory for tpu_custom_call.1']
    #allocation5 [shape = 'u8[2048]{0}', space=vmem, size = 0x800, scoped, tag = 'output window, operand 0, single buffered']
    %6 = vsyncpa [#allocation3], 0
    %7 = vsyncpa [#allocation4], 0
    // Predicated region
    $region2: #{tpu_custom_call.1} parent=1 // pred_check
      _
    $region3: #{tpu_custom_call.1} parent=1 // pred_check_branch
      %9 = sbr.rel (0) target = $region5
    $region4: #{tpu_custom_call.1} parent=1 // pred_region
      %s11 = ssub.s32 64, 64
      %12 = vsyncadd [#allocation3], %s11
      %s14 = sshll.u32 [#allocation2], 4
      %s15 = int_to_ptr.vmem [resolvable:$true] %s14
      %17 = dma.hbm_to_vmem [thread:$0]  %s0, 64, %s15, [#allocation3]
    $region5: #{tpu_custom_call.1} parent=1 // pred_fallthru
      _
    // Predicated region
    $region6: #{tpu_custom_call.1} parent=1 // pred_check
      _
    $region7: #{tpu_custom_call.1} parent=1 // pred_check_branch
      %19 = sbr.rel (0) target = $region9
    $region8: #{tpu_custom_call.1} parent=1 // pred_region
      %20 = dma.done [#allocation3], 64
    $region9: #{tpu_custom_call.1} parent=1 // pred_fallthru
      _
    %v21 = vld [vmem:[#allocation2] sm:$0xf]
    %v22 = vlaneseq
    %vm23 = vcmp.ge.s32.totalorder %v22, 0
    %vm24 = vcmp.lt.s32.totalorder %v22, 512
    %vm25 = vmand %vm23, %vm24
    %26 = vst.msk [vmem:[#allocation5] sm:$0xf] %vm25, %v21
    // Predicated region
    $region10: #{tpu_custom_call.1} parent=1 // pred_check
      _
    $region11: #{tpu_custom_call.1} parent=1 // pred_check_branch
      %28 = sbr.rel (0) target = $region13
    $region12: #{tpu_custom_call.1} parent=1 // pred_region
      %s30 = ssub.s32 64, 64
      %31 = vsyncadd [#allocation4], %s30
      %s33 = sshll.u32 [#allocation5], 4
      %s34 = int_to_ptr.vmem [resolvable:$true] %s33
      %36 = dma.vmem_to_hbm [thread:$0]  %s34, 64, %s1, [#allocation4]
    $region13: #{tpu_custom_call.1} parent=1 // pred_fallthru
      _
    // Predicated region
    $region14: #{tpu_custom_call.1} parent=1 // pred_check
      _
    $region15: #{tpu_custom_call.1} parent=1 // pred_check_branch
      %38 = sbr.rel (0) target = $region17
    $region16: #{tpu_custom_call.1} parent=1 // pred_region
      %39 = dma.done [#allocation4], 64
    $region17: #{tpu_custom_call.1} parent=1 // pred_fallthru
      _
    %40 = vsyncpa [#allocation3], 1
    %41 = vsyncpa [#allocation4], 1

</llo_original>
